<compile_context>
chip_gen: v6e
topology: v6e:2x2x1
jax: 0.10.0
libtpu: 0.0.40
codegen_flags: <defaults>
</compile_context>

<pallas_src>
import functools

import jax
import jax.numpy as jnp
from jax.experimental import pallas as pl
from jax.experimental.pallas import tpu as pltpu


_SCALES = (1, 2, 4, 8)            # 2**scale for scale in range(4)
_MAX_SCALE = max(_SCALES)         # halo rows carried across H tiles
_N_STATS = 1 + 2 * len(_SCALES)   # berhu sum + 4 grad sums + 4 mask sums
_STATS_LANES = 128                # one lane-dense store per image
_VMEM_LIMIT = 32 * 1024 * 1024    # fits v7x's 64 MiB physical VMEM with headroom


def _shift_up(x, s, axis):
    """Return y with y[..., i] = x[..., i+s] along `axis` (wrap ignored by caller).

    pltpu.roll follows np.roll semantics: roll(x, size-s)[i] == x[(i+s) % size].
    Wrapped positions are zeroed by the caller's edge masks.
    """
    size = x.shape[axis]
    amount = (size - s) % size
    if amount == 0:
        return x
    return pltpu.roll(x, amount, axis=axis)


# ----------------------------------------------------------------------------
# Kernel 1: per-image max of |pred - target|  (for the BerHu threshold c)
# ----------------------------------------------------------------------------
def _max_kernel(p_ref, t_ref, o_ref, acc_ref):
    h = pl.program_id(1)

    @pl.when(h == 0)
    def _():
        acc_ref[...] = jnp.zeros_like(acc_ref)   # |diff| >= 0, zero init is safe

    tile_max = jnp.max(jnp.abs(p_ref[...] - t_ref[...]))
    acc_ref[...] = jnp.maximum(acc_ref[...], tile_max)

    @pl.when(h == pl.num_programs(1) - 1)
    def _():
        o_ref[0] = acc_ref[...]


def _abs_max(pred, target, tile_rows):
    N, H, W = pred.shape
    n_h = H // tile_rows
    per_image = pl.pallas_call(
        _max_kernel,
        out_shape=jax.ShapeDtypeStruct((N, 1, 1), jnp.float32),
        grid=(N, n_h),
        in_specs=[
            pl.BlockSpec((1, tile_rows, W), lambda b, h: (b, h, 0)),
            pl.BlockSpec((1, tile_rows, W), lambda b, h: (b, h, 0)),
        ],
        out_specs=pl.BlockSpec((1, 1, 1), lambda b, h: (b, 0, 0)),
        scratch_shapes=[pltpu.VMEM((1, 1), jnp.float32)],
        compiler_params=pltpu.CompilerParams(
            dimension_semantics=("parallel", "arbitrary"),
            vmem_limit_bytes=_VMEM_LIMIT,
        ),
    )(pred, target)
    return jnp.max(per_image)


# ----------------------------------------------------------------------------
# Kernel 2 (fused): BerHu masked sum + 4-scale gradient sums + per-scale mask
# sums, accumulated across H tiles, emitted as one lane-packed row per image.
# ----------------------------------------------------------------------------
def _fused_kernel(p_ref, t_ref, m_ref, sc_ref, out_ref,
                  acc_ref, carry_d_ref, carry_m_ref, *, multi_tile):
    h = pl.program_id(1)
    n_h = pl.num_programs(1)

    p = p_ref[0]   # (TH, W)
    t = t_ref[0]
    m = m_ref[0]
    TH, W = p.shape

    c = sc_ref[0, 0]       # BerHu threshold  (max |pred - target| / 5)
    inv_2c = sc_ref[0, 1]  # 1/(2c), 0 when c == 0 (guarded in the wrapper)

    @pl.when(h == 0)
    def _():
        acc_ref[...] = jnp.zeros_like(acc_ref)

    # ---- BerHu data term ----------------------------------------------------
    x = p - t
    ax = jnp.abs(x)
    berhu = jnp.where(ax <= c, ax, (x * x + c * c) * inv_2c)
    berhu_sum = jnp.sum(berhu * m)

    # ---- multi-scale gradient term -------------------------------------------
    diff = m * x

    # Selection/edge masks from thin iotas (no (H,W) int32 iotas, no (W,W)/(H,H)
    # matrices).  Local row index == global row index mod s because the tile
    # height is a multiple of 8 >= max scale.
    rows = jax.lax.broadcasted_iota(jnp.int32, (TH, 1), 0)
    cols = jax.lax.broadcasted_iota(jnp.int32, (1, W), 1)
    lane = jax.lax.broadcasted_iota(jnp.int32, (1, _STATS_LANES), 1)

    grad_sums = []
    mask_sums = []
    col_sels = []
    for s in _SCALES:
        row_sel = ((rows & (s - 1)) == 0).astype(jnp.float32)        # (TH, 1)
        col_sel = ((cols & (s - 1)) == 0).astype(jnp.float32)        # (1, W)
        col_pair = col_sel * (cols < (W - s)).astype(jnp.float32)    # gx edge
        row_pair = row_sel * (rows < (TH - s)).astype(jnp.float32)   # gy edge
        col_sels.append(col_sel)

        mask_sums.append(jnp.sum(m * (row_sel * col_sel)))

        # shift-by-s along lanes / sublanes via XLU roll (wrap masked out above)
        dxs = _shift_up(diff, s, axis=1)
        mxs = _shift_up(m, s, axis=1)
        gx = jnp.abs(dxs - diff) * (mxs * m) * (row_sel * col_pair)

        dys = _shift_up(diff, s, axis=0)
        mys = _shift_up(m, s, axis=0)
        gy = jnp.abs(dys - diff) * (mys * m) * (row_pair * col_sel)

        grad_sums.append(jnp.sum(gx) + jnp.sum(gy))

    # One lane-packed accumulation per grid step.
    vals = [berhu_sum] + grad_sums + mask_sums
    tile_stats = jnp.zeros((1, _STATS_LANES), jnp.float32)
    for idx, v in enumerate(vals):
        tile_stats = tile_stats + jnp.where(lane == idx, v, 0.0)
    acc_ref[...] = acc_ref[...] + tile_stats

    if multi_tile:
        # grad_y pairs straddling the previous tile boundary: exactly one
        # selected row per scale (global row h*TH - s), carried in VMEM.
        @pl.when(h > 0)
        def _():
            d0 = diff[0:1, :]
            m0 = m[0:1, :]
            extra = jnp.zeros((1, _STATS_LANES), jnp.float32)
            for k, s in enumerate(_SCALES):
                d_prev = carry_d_ref[_MAX_SCALE - s:_MAX_SCALE - s + 1, :]
                m_prev = carry_m_ref[_MAX_SCALE - s:_MAX_SCALE - s + 1, :]
                gy_b = jnp.sum(jnp.abs(d0 - d_prev) * (m0 * m_prev) * col_sels[k])
                extra = extra + jnp.where(lane == 1 + k, gy_b, 0.0)
            acc_ref[...] = acc_ref[...] + extra

        # Carry the last 8 rows of this tile for the next tile's boundary term.
        carry_d_ref[...] = diff[TH - _MAX_SCALE:, :]
        carry_m_ref[...] = m[TH - _MAX_SCALE:, :]

    @pl.when(h == n_h - 1)
    def _():
        out_ref[0] = acc_ref[...]


def _fused_sums(pred, target, mask, c, tile_rows):
    N, H, W = pred.shape
    n_h = H // tile_rows
    multi_tile = n_h > 1

    inv_2c = jnp.where(c > 0, 0.5 / jnp.maximum(c, 1e-30), 0.0)
    scalars = jnp.stack([c, inv_2c]).reshape(1, 2).astype(jnp.float32)

    kernel = functools.partial(_fused_kernel, multi_tile=multi_tile)

    stats = pl.pallas_call(
        kernel,
        out_shape=jax.ShapeDtypeStruct((N, 1, _STATS_LANES), jnp.float32),
        grid=(N, n_h),
        in_specs=[
            pl.BlockSpec((1, tile_rows, W), lambda b, h: (b, h, 0)),
            pl.BlockSpec((1, tile_rows, W), lambda b, h: (b, h, 0)),
            pl.BlockSpec((1, tile_rows, W), lambda b, h: (b, h, 0)),
            pl.BlockSpec(memory_space=pltpu.MemorySpace.SMEM),  # [c, 1/(2c)]
        ],
        out_specs=pl.BlockSpec((1, 1, _STATS_LANES), lambda b, h: (b, 0, 0)),
        scratch_shapes=[
            pltpu.VMEM((1, _STATS_LANES), jnp.float32),   # stat accumulator
            pltpu.VMEM((_MAX_SCALE, W), jnp.float32),     # carried diff rows
            pltpu.VMEM((_MAX_SCALE, W), jnp.float32),     # carried mask rows
        ],
        compiler_params=pltpu.CompilerParams(
            dimension_semantics=("parallel", "arbitrary"),
            vmem_limit_bytes=_VMEM_LIMIT,
        ),
    )(pred, target, mask, scalars)

    berhu_sum = stats[:, 0, 0]                              # (N,)
    grad_sums = stats[:, 0, 1:1 + len(_SCALES)]             # (N, 4)
    mask_sums = stats[:, 0, 1 + len(_SCALES):_N_STATS]      # (N, 4)
    return berhu_sum, grad_sums, mask_sums


# ----------------------------------------------------------------------------
# Wrapper (padding, tile-size choice, scalar glue in plain JAX)
# ----------------------------------------------------------------------------
def _choose_tile_rows(H, max_rows):
    best = 8
    for cand in range(8, min(H, max(8, max_rows)) + 1, 8):
        if H % cand == 0:
            best = cand
    return best


def _pad_to(x, h_pad, w_pad):
    _, H, W = x.shape
    if H == h_pad and W == w_pad:
        return x
    return jnp.pad(x, ((0, 0), (0, h_pad - H), (0, w_pad - W)))


def berhu_module_forward(pred, target, mask, awl_params, *, max_tile_rows=256):
    N, H, W = pred.shape

    # Pad H to a multiple of 8 and W to a multiple of 128 only when misaligned
    # (zero-mask padding contributes nothing to any statistic); production depth
    # maps are already aligned so this is a no-op there.
    h_pad = max(8, -(-H // 8) * 8)
    w_pad = max(128, -(-W // 128) * 128)
    pred_p = _pad_to(pred.astype(jnp.float32), h_pad, w_pad)
    target_p = _pad_to(target.astype(jnp.float32), h_pad, w_pad)
    mask_p = _pad_to(mask.astype(jnp.float32), h_pad, w_pad)

    tile_rows = _choose_tile_rows(h_pad, max_tile_rows)

    c = _abs_max(pred_p, target_p, tile_rows) / 5.0
    berhu_sum, grad_sums, mask_sums = _fused_sums(pred_p, target_p, mask_p, c,
                                                  tile_rows)

    m0 = jnp.sum(mask_sums[:, 0])
    data_loss = jnp.where(m0 > 0, jnp.sum(berhu_sum) / m0, 0.0)

    reg_loss = jnp.float32(0.0)
    for k in range(len(_SCALES)):
        ms = jnp.sum(mask_sums[:, k])
        gs = jnp.sum(grad_sums[:, k])
        reg_loss = reg_loss + jnp.where(ms > 0, gs / ms, 0.0)

    losses = jnp.stack([data_loss, reg_loss])
    # AutomaticWeightedLoss: sum_i 0.5/p_i^2 * L_i + log(1 + p_i^2)
    return jnp.sum(0.5 / (awl_params ** 2) * losses + jnp.log1p(awl_params ** 2))


# ----------------------------------------------------------------------------
# Pure-JAX reference (mirrors the PyTorch code) for a correctness check
# ----------------------------------------------------------------------------
def _ref_forward(pred, target, mask, awl_params):
    def red(image_loss, M):
        div = jnp.sum(M)
        return jnp.where(div > 0, jnp.sum(image_loss) / div, 0.0)

    M = jnp.sum(mask, (1, 2))
    x = pred - target
    ax = jnp.abs(x)
    c = jnp.max(ax) / 5.0
    leq = (ax <= c).astype(jnp.float32)
    l2 = (x ** 2 + c ** 2) / (2.0 * c)
    il = leq * ax + (1.0 - leq) * l2
    data_loss = red(il * mask, M)

    reg = jnp.float32(0.0)
    for sc in range(4):
        st = 2 ** sc
        p = pred[:, ::st, ::st]
        t = target[:, ::st, ::st]
        m = mask[:, ::st, ::st]
        Mm = jnp.sum(m, (1, 2))
        diff = m * (p - t)
        gx = jnp.abs(diff[:, :, 1:] - diff[:, :, :-1]) * (m[:, :, 1:] * m[:, :, :-1])
        gy = jnp.abs(diff[:, 1:, :] - diff[:, :-1, :]) * (m[:, 1:, :] * m[:, :-1, :])
        il2 = jnp.sum(gx, (1, 2)) + jnp.sum(gy, (1, 2))
        reg = reg + red(il2, Mm)

    losses = jnp.stack([data_loss, reg])
    return jnp.sum(0.5 / (awl_params ** 2) * losses + jnp.log1p(awl_params ** 2))


if __name__ == "__main__":
    key = jax.random.PRNGKey(0)
    k1, k2, k3 = jax.random.split(key, 3)

    N, H, W = 2, 16, 16
    prediction = jax.random.normal(k1, (N, H, W), dtype=jnp.float32)
    target = jax.random.normal(k2, (N, H, W), dtype=jnp.float32)
    mask = (jax.random.uniform(k3, (N, H, W)) > 0.3).astype(jnp.float32)

    # AutomaticWeightedLoss(2) parameters initialized deterministically to ones.
    awl_params = jnp.ones((2,), dtype=jnp.float32)

    # max_tile_rows=8 -> two H tiles at H=16, exercising the cross-tile grad_y
    # halo-carry path as well as the accumulator init/finalize logic.
    out = berhu_module_forward(prediction, target, mask, awl_params,
                               max_tile_rows=8)
    out = jax.block_until_ready(out)

    ref = jax.block_until_ready(_ref_forward(prediction, target, mask, awl_params))
    assert jnp.allclose(out, ref, rtol=1e-4, atol=1e-5), (out, ref)

    print("KERNEL_OK")
</pallas_src>

<mosaic_0001>
module attributes {stable_mosaic.version = 11 : i64} {
  func.func @_max_kernel(%arg0: i32, %arg1: i32, %arg2: memref<1x8x128xf32, #tpu.memory_space<vmem>>, %arg3: memref<1x8x128xf32, #tpu.memory_space<vmem>>, %arg4: memref<1x1x1xf32, #tpu.memory_space<vmem>>, %arg5: memref<1x1xf32, #tpu.memory_space<vmem>>) attributes {dimension_semantics = [#tpu.dimension_semantics<parallel>, #tpu.dimension_semantics<arbitrary>], iteration_bounds = array<i64: 2, 2>, scalar_prefetch = 0 : i64, scratch_operands = 1 : i64, tpu.core_type = #tpu.core_type<tc>, window_params = [{transform_indices = @transform_0, window_bounds = array<i64: 1, 8, 128>}, {transform_indices = @transform_1, window_bounds = array<i64: 1, 8, 128>}, {transform_indices = @transform_2, window_bounds = array<i64: 1, 1, 1>}]} {
    %c0_i32 = arith.constant 0 : i32
    %0 = arith.cmpi eq, %arg1, %c0_i32 : i32
    %1 = arith.extui %0 : i1 to i32
    %c0_i32_0 = arith.constant 0 : i32
    %2 = arith.cmpi ne, %1, %c0_i32_0 : i32
    scf.if %2 {
      %cst_11 = arith.constant 0.000000e+00 : f32
      %18 = vector.broadcast %cst_11 : f32 to vector<1x1xf32>
      %c0_12 = arith.constant 0 : index
      %c0_13 = arith.constant 0 : index
      %19 = vector.load %arg5[%c0_12, %c0_13] : memref<1x1xf32, #tpu.memory_space<vmem>>, vector<1x1xf32>
      tpu.vector_store %arg5[%c0_12, %c0_13], %18 {strides = array<i32>} : memref<1x1xf32, #tpu.memory_space<vmem>>, vector<1x1xf32>,
    } else {
    }
    %c0 = arith.constant 0 : index
    %c0_1 = arith.constant 0 : index
    %c0_2 = arith.constant 0 : index
    %3 = vector.load %arg2[%c0, %c0_1, %c0_2] : memref<1x8x128xf32, #tpu.memory_space<vmem>>, vector<1x8x128xf32>
    %c0_3 = arith.constant 0 : index
    %c0_4 = arith.constant 0 : index
    %c0_5 = arith.constant 0 : index
    %4 = vector.load %arg3[%c0_3, %c0_4, %c0_5] : memref<1x8x128xf32, #tpu.memory_space<vmem>>, vector<1x8x128xf32>
    %5 = arith.subf %3, %4 : vector<1x8x128xf32>
    %6 = math.absf %5 : vector<1x8x128xf32>
    %7 = vector.shape_cast %6 : vector<1x8x128xf32> to vector<1x1x8x128xf32>
    %cst = arith.constant dense<0xFF800000> : vector<1xf32>
    %8 = vector.multi_reduction <maximumf>, %7, %cst [1, 2, 3] : vector<1x1x8x128xf32> to vector<1xf32>
    %9 = vector.shape_cast %8 : vector<1xf32> to vector<1x1x1x1xf32>
    %10 = vector.extract %9[0, 0, 0, 0] : f32 from vector<1x1x1x1xf32>
    %c0_6 = arith.constant 0 : index
    %c0_7 = arith.constant 0 : index
    %11 = vector.load %arg5[%c0_6, %c0_7] : memref<1x1xf32, #tpu.memory_space<vmem>>, vector<1x1xf32>
    %12 = vector.broadcast %10 : f32 to vector<1x1xf32>
    %13 = arith.maximumf %11, %12 : vector<1x1xf32>
    %c0_8 = arith.constant 0 : index
    %c0_9 = arith.constant 0 : index
    %14 = vector.load %arg5[%c0_8, %c0_9] : memref<1x1xf32, #tpu.memory_space<vmem>>, vector<1x1xf32>
    tpu.vector_store %arg5[%c0_8, %c0_9], %13 {strides = array<i32>} : memref<1x1xf32, #tpu.memory_space<vmem>>, vector<1x1xf32>,
    %c1_i32 = arith.constant 1 : i32
    %15 = arith.cmpi eq, %arg1, %c1_i32 : i32
    %16 = arith.extui %15 : i1 to i32
    %c0_i32_10 = arith.constant 0 : i32
    %17 = arith.cmpi ne, %16, %c0_i32_10 : i32
    scf.if %17 {
      %c0_11 = arith.constant 0 : index
      %c0_12 = arith.constant 0 : index
      %18 = vector.load %arg5[%c0_11, %c0_12] : memref<1x1xf32, #tpu.memory_space<vmem>>, vector<1x1xf32>
      %c0_13 = arith.constant 0 : index
      %c0_14 = arith.constant 0 : index
      %c0_15 = arith.constant 0 : index
      %19 = vector.load %arg4[%c0_13, %c0_14, %c0_15] : memref<1x1x1xf32, #tpu.memory_space<vmem>>, vector<1x1x1xf32>
      %20 = vector.shape_cast %19 : vector<1x1x1xf32> to vector<1x1xf32>
      %21 = vector.shape_cast %18 : vector<1x1xf32> to vector<1x1x1xf32>
      tpu.vector_store %arg4[%c0_13, %c0_14, %c0_15], %21 {strides = array<i32>} : memref<1x1x1xf32, #tpu.memory_space<vmem>>, vector<1x1x1xf32>,
    } else {
    }
    return
  }
  func.func @transform_0(%arg0: i32, %arg1: i32) -> (i32, i32, i32) {
    %c0_i32 = arith.constant 0 : i32
    %c0_i32_0 = arith.constant 0 : i32
    return %arg0, %arg1, %c0_i32 : i32, i32, i32
  }
  func.func @transform_1(%arg0: i32, %arg1: i32) -> (i32, i32, i32) {
    %c0_i32 = arith.constant 0 : i32
    %c0_i32_0 = arith.constant 0 : i32
    return %arg0, %arg1, %c0_i32 : i32, i32, i32
  }
  func.func @transform_2(%arg0: i32, %arg1: i32) -> (i32, i32, i32) {
    %c0_i32 = arith.constant 0 : i32
    %c0_i32_0 = arith.constant 0 : i32
    %c0_i32_1 = arith.constant 0 : i32
    return %arg0, %c0_i32, %c0_i32_0 : i32, i32, i32
  }
}

</mosaic_0001>

<llo_original>
// kernel: tpu_custom_call.1
$region0: #{tpu_custom_call.1}
  #allocation0 [shape = 'u32[]', space=smem, size = 0x4, offset = 0x4, fixed_abs, tag = 'smem constant byte address 0x4 - core index']
  #allocation1 [shape = 'u32[144,128]{1,0:T(1,128)}', space=vmem, size = 0x12000, scoped, tag = 'internal scratch']
  #allocation2 [shape = 'f32[1,1]{1,0:T(1,128)}', space=vmem, size = 0x200, scoped, tag = 'scratch operand']
  %s0 = inlined_call_operand.hbm [shape: f32[2,16,128], index: 0, kind: input, shape index: {}]
  %s1 = inlined_call_operand.hbm [shape: f32[2,16,128], index: 1, kind: input, shape index: {}]
  %s2 = inlined_call_operand.vmem [shape: f32[2,1,1], index: 2, kind: output, shape index: {}]
  %s3 = sld [smem:[#allocation0]]
  $region57: #{tpu_custom_call.1} parent=0
    _
  %s5 = ssub.s32 1, %s3
  %s6 = scalar_select 0, %s5, %s3
  $region1: #{tpu_custom_call.1} parent=0
    #allocation3 [shape = 'u8[8192]{0}', space=vmem, size = 0x2000, scoped, tag = 'input window, operand 0']
    #allocation4 [shape = 's32[2]{0}', space=sflag, size = 0x8, scoped, tag = 'scoped memory for tpu_custom_call.1']
    #allocation5 [shape = 'u8[8192]{0}', space=vmem, size = 0x2000, scoped, tag = 'input window, operand 1']
    #allocation6 [shape = 's32[2]{0}', space=sflag, size = 0x8, scoped, tag = 'scoped memory for tpu_custom_call.1']
    %7 = vsyncpa [#allocation4], 0
    %s8 = scalar_lea.sflag [#allocation4], 1
    %9 = vsyncpa %s8, 0
    %10 = vsyncpa [#allocation6], 0
    %s11 = scalar_lea.sflag [#allocation6], 1
    %12 = vsyncpa %s11, 0
    loop: start=0, step=1, limit=6
    $region2: #{tpu_custom_call.1} parent=1 // loop_pre_header
      _
    $region3: #{tpu_custom_call.1} parent=1 // loop_header
      %s14 = sphi 0, %s18
      %p15 = scmp.ge.s32.totalorder %s14, 6
      %s21 = sphi 0, %s33
      %s22 = sphi 0, %s29
      %s23 = sphi 0, %s21
      %s24 = sphi 0, %s22
      %s25 = sphi 0, %s23
      %s26 = sphi 0, %s24
      %s38 = sphi 0, %s40
      %s41 = sphi 0, %s38
      %s42 = sphi 0, %s41
      %s58 = sphi 0, %s42
      %s66 = sphi 0, %s68
      %s69 = sphi 0, %s66
      %s70 = sphi 0, %s69
      %s86 = sphi 0, %s70
      %s92 = sphi 0, %s94
      %s95 = sphi 0, %s92
      %s96 = sphi 0, %s95
      %s112 = sphi 0, %s96
    $region4: #{tpu_custom_call.1} parent=1 // loop_header_branch
      %17 = sbr.rel (%p15) target = $region8
    $region5: #{tpu_custom_call.1} parent=1 // loop_body
      %s19 = ssub.s32 %s14, 1
      %s20 = ssub.s32 %s14, 2
      %s27 = sadd.s32 1, %s22
      %p28 = scmp.ge.s32.totalorder %s27, 2
      %s29 = scalar_select %p28, 0, %s27
      %s30 = sadd.s32 1, %s21
      %s31 = scalar_select %p28, %s30, %s21
      %p32 = scmp.ge.s32.totalorder %s31, 2
      %s33 = scalar_select %p32, 0, %s31
      %s34 = ssub.s32 %s21, %s33
      %s35 = ssub.s32 %s22, %s29
      %s36 = sor.u32 %s34, %s35
      %p37 = scmp.eq.s32.totalorder %s36, 0
      %s39 = sadd.s32 %s38, 1
      %s40 = scalar_select %p37, %s38, %s39
      %p43 = pneg %p37
      %p44 = scmp.eq.s32.totalorder %s14, 3
      %p45 = por %p43, %p44
      %p46 = scmp.ne.s32.totalorder %s38, %s41
      %p47 = scmp.eq.s32.totalorder %s14, 0
      %p48 = por %p46, %p47
      %p49 = scmp.ne.s32.totalorder %s38, %s41
      %p50 = scmp.eq.s32.totalorder %s19, 3
      %p51 = por %p49, %p50
      %p52 = scmp.ne.s32.totalorder %s41, %s42
      %p53 = scmp.eq.s32.totalorder %s19, 0
      %p54 = por %p52, %p53
      %p55 = scmp.ne.s32.totalorder %s41, %s42
      %p56 = scmp.eq.s32.totalorder %s20, 3
      %p57 = por %p55, %p56
      %p59 = scmp.ne.s32.totalorder %s42, %s58
      %p60 = scmp.eq.s32.totalorder %s20, 0
      %p61 = por %p59, %p60
      %s62 = ssub.s32 %s21, %s33
      %s63 = ssub.s32 %s22, %s29
      %s64 = sor.u32 %s62, %s63
      %p65 = scmp.eq.s32.totalorder %s64, 0
      %s67 = sadd.s32 %s66, 1
      %s68 = scalar_select %p65, %s66, %s67
      %p71 = pneg %p65
      %p72 = scmp.eq.s32.totalorder %s14, 3
      %p73 = por %p71, %p72
      %p74 = scmp.ne.s32.totalorder %s66, %s69
      %p75 = scmp.eq.s32.totalorder %s14, 0
      %p76 = por %p74, %p75
      %p77 = scmp.ne.s32.totalorder %s66, %s69
      %p78 = scmp.eq.s32.totalorder %s19, 3
      %p79 = por %p77, %p78
      %p80 = scmp.ne.s32.totalorder %s69, %s70
      %p81 = scmp.eq.s32.totalorder %s19, 0
      %p82 = por %p80, %p81
      %p83 = scmp.ne.s32.totalorder %s69, %s70
      %p84 = scmp.eq.s32.totalorder %s20, 3
      %p85 = por %p83, %p84
      %p87 = scmp.ne.s32.totalorder %s70, %s86
      %p88 = scmp.eq.s32.totalorder %s20, 0
      %p89 = por %p87, %p88
      %s90 = ssub.s32 %s21, %s33
      %p91 = scmp.eq.s32.totalorder %s90, 0
      %s93 = sadd.s32 %s92, 1
      %s94 = scalar_select %p91, %s92, %s93
      %p97 = pneg %p91
      %p98 = scmp.eq.s32.totalorder %s14, 3
      %p99 = por %p97, %p98
      %p100 = scmp.ne.s32.totalorder %s92, %s95
      %p101 = scmp.eq.s32.totalorder %s14, 0
      %p102 = por %p100, %p101
      %p103 = scmp.ne.s32.totalorder %s92, %s95
      %p104 = scmp.eq.s32.totalorder %s19, 3
      %p105 = por %p103, %p104
      %p106 = scmp.ne.s32.totalorder %s95, %s96
      %p107 = scmp.eq.s32.totalorder %s19, 0
      %p108 = por %p106, %p107
      %p109 = scmp.ne.s32.totalorder %s95, %s96
      %p110 = scmp.eq.s32.totalorder %s20, 3
      %p111 = por %p109, %p110
      %p113 = scmp.ne.s32.totalorder %s96, %s112
      %p114 = scmp.eq.s32.totalorder %s20, 0
      %p115 = por %p113, %p114
      %p116 = scmp.le.s32.totalorder 1, %s14
      %p117 = scmp.lt.s32.totalorder %s14, 5
      %p118 = pnand %p116, %p117
      %p119 = pneg %p118
      // Predicated region
      $region9: #{tpu_custom_call.1} parent=5 // pred_check
        _
      $region10: #{tpu_custom_call.1} parent=5 // pred_check_branch
        %121 = sbr.rel (%p118) target = $region12
      $region11: #{tpu_custom_call.1} parent=5 // pred_region
        %s122 = ssub.s32 %s14, 1
      $region12: #{tpu_custom_call.1} parent=5 // pred_fallthru
        _
      %p123 = scmp.lt.s32.totalorder %s14, 4
      // Predicated region
      $region13: #{tpu_custom_call.1} parent=5 // pred_check
        %p124 = pneg %p123
      $region14: #{tpu_custom_call.1} parent=5 // pred_check_branch
        %126 = sbr.rel (%p124) target = $region16
      $region15: #{tpu_custom_call.1} parent=5 // pred_region
        // Predicated region
        $region17: #{tpu_custom_call.1} parent=15 // pred_check
          %p127 = pneg %p48
        $region18: #{tpu_custom_call.1} parent=15 // pred_check_branch
          %129 = sbr.rel (%p127) target = $region20
        $region19: #{tpu_custom_call.1} parent=15 // pred_region
          %s130 = sand.u32 %s38, 1
          %s131 = scalar_lea.sflag [#allocation4], %s130
          %s132 = sand.u32 %s38, 1
          %s133 = smul.addr %s132, 8
          %s134 = scalar_lea.vmem [#allocation3], %s133
          %s136 = ssub.s32 128, 128
          %137 = vsyncadd %s131, %s136
          %s138 = smul.addr %s21, 2
          %s139 = sadd.s32 %s22, %s138
          %s140 = smul.addr %s139, 128
          %s141 = scalar_lea.hbm %s0, %s140
          %s143 = sshll.u32 %s134, 4
          %s144 = int_to_ptr.vmem [resolvable:$true] %s143
          %146 = dma.hbm_to_vmem [thread:$0]  %s141, 128, %s144, %s131
        $region20: #{tpu_custom_call.1} parent=15 // pred_fallthru
          _
        // Predicated region
        $region21: #{tpu_custom_call.1} parent=15 // pred_check
          %p147 = pneg %p76
        $region22: #{tpu_custom_call.1} parent=15 // pred_check_branch
          %149 = sbr.rel (%p147) target = $region24
        $region23: #{tpu_custom_call.1} parent=15 // pred_region
          %s150 = sand.u32 %s66, 1
          %s151 = scalar_lea.sflag [#allocation6], %s150
          %s152 = sand.u32 %s66, 1
          %s153 = smul.addr %s152, 8
          %s154 = scalar_lea.vmem [#allocation5], %s153
          %s156 = ssub.s32 128, 128
          %157 = vsyncadd %s151, %s156
          %s158 = smul.addr %s21, 2
          %s159 = sadd.s32 %s22, %s158
          %s160 = smul.addr %s159, 128
          %s161 = scalar_lea.hbm %s1, %s160
          %s163 = sshll.u32 %s154, 4
          %s164 = int_to_ptr.vmem [resolvable:$true] %s163
          %166 = dma.hbm_to_vmem [thread:$0]  %s161, 128, %s164, %s151
        $region24: #{tpu_custom_call.1} parent=15 // pred_fallthru
          _
      $region16: #{tpu_custom_call.1} parent=5 // pred_fallthru
        _
      %p167 = scmp.le.s32.totalorder 1, %s14
      %p168 = scmp.lt.s32.totalorder %s14, 5
      %p169 = pnand %p167, %p168
      %p170 = pneg %p169
      // Predicated region
      $region25: #{tpu_custom_call.1} parent=5 // pred_check
        _
      $region26: #{tpu_custom_call.1} parent=5 // pred_check_branch
        %172 = sbr.rel (%p169) target = $region28
      $region27: #{tpu_custom_call.1} parent=5 // pred_region
        %s173 = ssub.s32 %s14, 1
        %s174 = sand.u32 %s41, 1
        %s175 = scalar_lea.sflag [#allocation4], %s174
        %s176 = sand.u32 %s41, 1
        %s177 = smul.addr %s176, 8
        %s178 = scalar_lea.vmem [#allocation3], %s177
        // Predicated region
        $region29: #{tpu_custom_call.1} parent=27 // pred_check
          %p179 = pneg %p54
        $region30: #{tpu_custom_call.1} parent=27 // pred_check_branch
          %181 = sbr.rel (%p179) target = $region32
        $region31: #{tpu_custom_call.1} parent=27 // pred_region
          %182 = dma.done %s175, 128
        $region32: #{tpu_custom_call.1} parent=27 // pred_fallthru
          _
        %s183 = sand.u32 %s69, 1
        %s184 = scalar_lea.sflag [#allocation6], %s183
        %s185 = sand.u32 %s69, 1
        %s186 = smul.addr %s185, 8
        %s187 = scalar_lea.vmem [#allocation5], %s186
        // Predicated region
        $region33: #{tpu_custom_call.1} parent=27 // pred_check
          %p188 = pneg %p82
        $region34: #{tpu_custom_call.1} parent=27 // pred_check_branch
          %190 = sbr.rel (%p188) target = $region36
        $region35: #{tpu_custom_call.1} parent=27 // pred_region
          %191 = dma.done %s184, 128
        $region36: #{tpu_custom_call.1} parent=27 // pred_fallthru
          _
        %s192 = sand.u32 %s41, 1
        %s193 = scalar_lea.sflag [#allocation4], %s192
        %s194 = sand.u32 %s41, 1
        %s195 = smul.addr %s194, 8
        %s196 = scalar_lea.vmem [#allocation3], %s195
        %p197 = pneg %p54
        %p198 = pneg %p51
        %s199 = sand.u32 %s69, 1
        %s200 = scalar_lea.sflag [#allocation6], %s199
        %s201 = sand.u32 %s69, 1
        %s202 = smul.addr %s201, 8
        %s203 = scalar_lea.vmem [#allocation5], %s202
        %p204 = pneg %p82
        %p205 = pneg %p79
        %p206 = pneg %p108
        %p207 = pneg %p105
        %p208 = scmp.lt.s32.totalorder %s23, 1
        %s209 = scalar_select %p208, %s23, 1
        %s210 = scalar_lea.vmem %s2, %s209
        %p211 = scmp.lt.s32.totalorder %s23, 1
        %s212 = scalar_select %p211, %s23, 1
        %s213 = scalar_lea.vmem %s2, %s212
        %p214 = scmp.eq.s32.totalorder %s24, 0
        // Predicated region
        $region37: #{tpu_custom_call.1} parent=27 // pred_check
          %p215 = pneg %p214
        $region38: #{tpu_custom_call.1} parent=27 // pred_check_branch
          %217 = sbr.rel (%p215) target = $region40
        $region39: #{tpu_custom_call.1} parent=27 // pred_region
          %vm218 = vcmask 0
          %219 = vst.msk [vmem:[#allocation2] sm:$0x1] %vm218, 0.0
        $region40: #{tpu_custom_call.1} parent=27 // pred_fallthru
          _
        %v220 = vld [vmem:[%s178] sm:$0xff]
        %v221 = vld [vmem:[%s187] sm:$0xff]
        %v222 = vsub.f32 %v220, %v221
        %v223 = vand.u32 2147483647, %v222
        %224 = vmax.xlane.f32.xlu0 %v223
        %v225 = vpop.xlane.xlu0 %224
        %v226 = vrot.slane %v225, 4
        %v227 = vmax.f32 %v225, %v226
        %v228 = vrot.slane %v227, 2
        %v229 = vmax.f32 %v227, %v228
        %v230 = vrot.slane %v229, 1
        %v231 = vmax.f32 %v229, %v230
        %s232 = vtos %v231
        %v233 = vld [vmem:[#allocation2] sm:$0x1]
        %v234 = vstv %s232
        %v235 = vmax.f32 %v233, %v234
        %vm236 = vcmask 0
        %237 = vst.msk [vmem:[#allocation2] sm:$0x1] %vm236, %v235
        %p238 = scmp.eq.s32.totalorder %s24, 1
        // Predicated region
        $region41: #{tpu_custom_call.1} parent=27 // pred_check
          %p239 = pneg %p238
        $region42: #{tpu_custom_call.1} parent=27 // pred_check_branch
          %241 = sbr.rel (%p239) target = $region44
        $region43: #{tpu_custom_call.1} parent=27 // pred_region
          %v242 = vld [vmem:[#allocation2] sm:$0x1]
          %243 = vst.msk [vmem:[%s213] sm:$0x1] %vm236, %v242
        $region44: #{tpu_custom_call.1} parent=27 // pred_fallthru
          _
        %p244 = scmp.lt.s32.totalorder %s23, 1
        %s245 = scalar_select %p244, %s23, 1
        %s246 = scalar_lea.vmem %s2, %s245
        // Predicated region
        $region45: #{tpu_custom_call.1} parent=27 // pred_check
          %p247 = pneg %p105
        $region46: #{tpu_custom_call.1} parent=27 // pred_check_branch
          %249 = sbr.rel (%p247) target = $region48
        $region47: #{tpu_custom_call.1} parent=27 // pred_region
          _
        $region48: #{tpu_custom_call.1} parent=27 // pred_fallthru
          _
      $region28: #{tpu_custom_call.1} parent=5 // pred_fallthru
        _
      %p250 = scmp.le.s32.totalorder 2, %s14
      // Predicated region
      $region49: #{tpu_custom_call.1} parent=5 // pred_check
        %p251 = pneg %p250
      $region50: #{tpu_custom_call.1} parent=5 // pred_check_branch
        %253 = sbr.rel (%p251) target = $region52
      $region51: #{tpu_custom_call.1} parent=5 // pred_region
        %s254 = ssub.s32 %s14, 2
        // Predicated region
        $region53: #{tpu_custom_call.1} parent=51 // pred_check
          %p255 = pneg %p111
        $region54: #{tpu_custom_call.1} parent=51 // pred_check_branch
          %257 = sbr.rel (%p255) target = $region56
        $region55: #{tpu_custom_call.1} parent=51 // pred_region
          %p258 = scmp.lt.s32.totalorder %s25, 1
          %s259 = scalar_select %p258, %s25, 1
          %s260 = scalar_lea.vmem %s2, %s259
        $region56: #{tpu_custom_call.1} parent=51 // pred_fallthru
          _
      $region52: #{tpu_custom_call.1} parent=5 // pred_fallthru
        _
    $region6: #{tpu_custom_call.1} parent=1 // loop_footer
      %s18 = sadd.s32 1, %s14
    $region7: #{tpu_custom_call.1} parent=1 // loop_footer_branch
      %13 = sbr.rel target = $region3
    $region8: #{tpu_custom_call.1} parent=1 // loop_exit
      _
    %261 = vsyncpa [#allocation4], 1
    %s262 = scalar_lea.sflag [#allocation4], 1
    %263 = vsyncpa %s262, 1
    %264 = vsyncpa [#allocation6], 1
    %s265 = scalar_lea.sflag [#allocation6], 1
    %266 = vsyncpa %s265, 1

</llo_original>
